<compile_context>
chip_gen: v6e
topology: v6e:2x2x1
jax: 0.10.0
libtpu: 0.0.40
codegen_flags: <defaults>
</compile_context>

<pallas_src>
import functools

import jax
import jax.numpy as jnp
from jax.experimental import pallas as pl
from jax.experimental.pallas import tpu as pltpu

_MIB = 1024 * 1024


def _round_up(a, b):
    return (a + b - 1) // b * b


def _vmem_capacity_bytes():
    try:
        info = pltpu.get_tpu_info()
        cap = getattr(info, "vmem_capacity_bytes", None)
        if cap:
            return int(cap)
    except Exception:
        pass
    return 64 * _MIB  # conservative fallback (valid on every generation)


def _pick_tf(f_pad, tf_max):
    """Largest multiple-of-128 divisor of f_pad that is <= tf_max."""
    c = max(128, min(tf_max, f_pad) // 128 * 128)
    while c > 128:
        if f_pad % c == 0:
            return c
        c -= 128
    return 128


def _resident_est(tm, d, f, itemsize):
    # x + out tiles (double-buffered), whole w1/w2 (+double-buffer headroom),
    # biases, f32 hidden + cast copy.
    return (itemsize * (2 * tm * d + 2 * d * f + 2 * f * d + 2 * tm * d
                        + 2 * 8 * f + 2 * 8 * d)
            + tm * f * 4 + tm * f * itemsize)


def _tiled_est(tm, tf, d, itemsize, needs_acc):
    est = (itemsize * (2 * tm * d + 2 * d * tf + 2 * tf * d + 2 * tm * d
                       + 2 * 8 * tf + 2 * 8 * d)
           + tm * tf * 4 + tm * tf * itemsize)
    if needs_acc:
        est += tm * d * 4
    return est


# ------------------------------- kernels -----------------------------------

def _ffn_kernel_resident(x_ref, w1_ref, b1_ref, w2_ref, b2_ref, o_ref):
    # Whole w1/w2 resident in VMEM; single pass over each token tile.
    h = jnp.dot(x_ref[...], w1_ref[...], preferred_element_type=jnp.float32)
    h = jnp.maximum(h + b1_ref[...].astype(jnp.float32), 0.0)
    # TODO(synk): training-mode nn.Dropout (stochastic mask) not implemented;
    # forward matches the module in eval mode (dropout == identity).
    out = jnp.dot(h.astype(w2_ref.dtype), w2_ref[...],
                  preferred_element_type=jnp.float32)
    o_ref[...] = (out + b2_ref[...].astype(jnp.float32)).astype(o_ref.dtype)


def _ffn_kernel_tiled_f32out(x_ref, w1_ref, b1_ref, w2_ref, b2_ref, o_ref):
    # f32 output: accumulate directly into the resident output block (no scratch).
    k = pl.program_id(1)

    @pl.when(k == 0)
    def _init():
        o_ref[...] = jnp.broadcast_to(b2_ref[...].astype(o_ref.dtype), o_ref.shape)

    h = jnp.dot(x_ref[...], w1_ref[...], preferred_element_type=jnp.float32)
    h = jnp.maximum(h + b1_ref[...].astype(jnp.float32), 0.0)
    o_ref[...] += jnp.dot(h.astype(w2_ref.dtype), w2_ref[...],
                          preferred_element_type=jnp.float32)


def _ffn_kernel_tiled_acc(x_ref, w1_ref, b1_ref, w2_ref, b2_ref, o_ref, acc_ref):
    # Non-f32 output: f32 accumulator scratch, finalize + cast on the last slab.
    k = pl.program_id(1)

    @pl.when(k == 0)
    def _init():
        acc_ref[...] = jnp.zeros_like(acc_ref)

    h = jnp.dot(x_ref[...], w1_ref[...], preferred_element_type=jnp.float32)
    h = jnp.maximum(h + b1_ref[...].astype(jnp.float32), 0.0)
    acc_ref[...] += jnp.dot(h.astype(w2_ref.dtype), w2_ref[...],
                            preferred_element_type=jnp.float32)

    @pl.when(k == pl.num_programs(1) - 1)
    def _finalize():
        o_ref[...] = (acc_ref[...] + b2_ref[...].astype(jnp.float32)
                      ).astype(o_ref.dtype)


# ------------------------------- wrapper ------------------------------------

@functools.partial(jax.jit, static_argnames=("tm", "tf"))
def feed_forward_block(x, w1, b1, w2, b2, *, tm=512, tf=1024):
    """Fused FeedForwardBlock forward: relu(x @ w1 + b1) @ w2 + b2.

    x:  (..., d_model)
    w1: (d_model, d_ff)   == linear1.weight.T (pre-transposed outside hot path)
    b1: (d_ff,)
    w2: (d_ff, d_model)   == linear2.weight.T
    b2: (d_model,)
    """
    *lead, D = x.shape
    F = w1.shape[1]
    assert w1.shape == (D, F) and w2.shape == (F, D)
    assert b1.shape == (F,) and b2.shape == (D,)

    M = 1
    for s in lead:
        M *= s

    itemsize = jnp.dtype(x.dtype).itemsize
    out_f32 = jnp.dtype(x.dtype) == jnp.float32

    # Per-generation VMEM budget: ~110 MiB on v5e/v6e (128 MiB physical),
    # ~52 MiB on v7x (64 MiB per TensorCore), always <= reported capacity.
    vmem_cap = _vmem_capacity_bytes()
    budget = 110 * _MIB if vmem_cap >= 96 * _MIB else 52 * _MIB
    budget = min(budget, vmem_cap)

    # Lane-dense d_model (pad only when D % 128 != 0, e.g. tiny demos); d_ff is
    # only ever padded when F % 128 != 0 -- otherwise tf is picked as a divisor
    # of F so the big weights are never re-padded inside the hot path.
    D_pad = _round_up(D, 128)
    F_pad = _round_up(F, 128)

    # Token tile: fill MXU rows and amortize per-step overhead; clamp for small M.
    tm_eff = min(tm, _round_up(M, 8))

    needs_acc = not out_f32
    resident_ok = (
        2 * D_pad * F_pad * itemsize <= int(0.4 * budget)
        and _resident_est(tm_eff, D_pad, F_pad, itemsize) <= int(0.9 * budget)
    )

    if resident_ok:
        est = _resident_est(tm_eff, D_pad, F_pad, itemsize)
        tf_eff = F_pad
    else:
        tf_eff = _pick_tf(F_pad, tf)
        # Shrink tiles until the estimate fits the per-generation budget.
        while _tiled_est(tm_eff, tf_eff, D_pad, itemsize, needs_acc) > int(0.9 * budget):
            if tf_eff >= 256 and (tf_eff // 2) % 128 == 0:
                tf_eff //= 2
            elif tm_eff > 8:
                tm_eff = max(8, (tm_eff // 2 + 7) // 8 * 8)
            else:
                break
        est = _tiled_est(tm_eff, tf_eff, D_pad, itemsize, needs_acc)

    M_pad = _round_up(M, tm_eff)

    # --- prepare (padded) operands -------------------------------------------
    x2 = x.reshape(M, D)
    b1_2 = b1.reshape(1, F)
    b2_2 = b2.reshape(1, D)

    if D_pad != D:
        x2 = jnp.pad(x2, ((0, 0), (0, D_pad - D)))
        w1 = jnp.pad(w1, ((0, D_pad - D), (0, 0)))
        w2 = jnp.pad(w2, ((0, 0), (0, D_pad - D)))
        b2_2 = jnp.pad(b2_2, ((0, 0), (0, D_pad - D)))
    if F_pad != F:
        w1 = jnp.pad(w1, ((0, 0), (0, F_pad - F)))
        b1_2 = jnp.pad(b1_2, ((0, 0), (0, F_pad - F)))
        w2 = jnp.pad(w2, ((0, F_pad - F), (0, 0)))
    if M_pad != M:
        x2 = jnp.pad(x2, ((0, M_pad - M), (0, 0)))

    # --- grid / specs ---------------------------------------------------------
    if resident_ok:
        grid = (M_pad // tm_eff,)
        in_specs = [
            pl.BlockSpec((tm_eff, D_pad), lambda i: (i, 0)),   # x tile
            pl.BlockSpec((D_pad, F_pad), lambda i: (0, 0)),    # w1 (resident)
            pl.BlockSpec((1, F_pad), lambda i: (0, 0)),        # b1
            pl.BlockSpec((F_pad, D_pad), lambda i: (0, 0)),    # w2 (resident)
            pl.BlockSpec((1, D_pad), lambda i: (0, 0)),        # b2
        ]
        out_specs = pl.BlockSpec((tm_eff, D_pad), lambda i: (i, 0))
        kernel = _ffn_kernel_resident
        scratch = []
        dim_sem = ("parallel",)
    else:
        grid = (M_pad // tm_eff, F_pad // tf_eff)
        in_specs = [
            pl.BlockSpec((tm_eff, D_pad), lambda i, k: (i, 0)),  # x (resident over k)
            pl.BlockSpec((D_pad, tf_eff), lambda i, k: (0, k)),  # w1 slab
            pl.BlockSpec((1, tf_eff), lambda i, k: (0, k)),      # b1 slab
            pl.BlockSpec((tf_eff, D_pad), lambda i, k: (k, 0)),  # w2 slab
            pl.BlockSpec((1, D_pad), lambda i, k: (0, 0)),       # b2 (constant)
        ]
        out_specs = pl.BlockSpec((tm_eff, D_pad), lambda i, k: (i, 0))
        if out_f32:
            kernel = _ffn_kernel_tiled_f32out
            scratch = []
        else:
            kernel = _ffn_kernel_tiled_acc
            scratch = [pltpu.VMEM((tm_eff, D_pad), jnp.float32)]
        dim_sem = ("parallel", "arbitrary")

    vmem_limit = int(max(32 * _MIB, min(budget, int(est * 1.25))))
    if est > vmem_limit:
        vmem_limit = int(min(vmem_cap, int(est * 1.1)))

    out2 = pl.pallas_call(
        kernel,
        out_shape=jax.ShapeDtypeStruct((M_pad, D_pad), x.dtype),
        grid_spec=pltpu.PrefetchScalarGridSpec(
            num_scalar_prefetch=0,
            grid=grid,
            in_specs=in_specs,
            out_specs=out_specs,
            scratch_shapes=scratch,
        ),
        compiler_params=pltpu.CompilerParams(
            dimension_semantics=dim_sem,
            vmem_limit_bytes=vmem_limit,
        ),
    )(x2, w1, b1_2, w2, b2_2)

    out = out2[:M, :D]
    return out.reshape(*lead, D)


def _reference(x, w1, b1, w2, b2):
    h = jnp.maximum(jnp.einsum("bsd,df->bsf", x, w1) + b1, 0.0)
    return jnp.einsum("bsf,fd->bsd", h, w2) + b2


if __name__ == "__main__":
    # Small shapes consistent with the module: batch=2, seq=8, d_model=32, d_ff=128.
    B, S, D, F = 2, 8, 32, 128
    key = jax.random.PRNGKey(0)
    kx, kw1, kb1, kw2, kb2 = jax.random.split(key, 5)

    x = jax.random.normal(kx, (B, S, D), dtype=jnp.float32)
    # nn.Linear-style uniform(-1/sqrt(fan_in), 1/sqrt(fan_in)) init, stored in
    # kernel-friendly (in, out) layout (== weight.T) so no per-call transpose.
    bd1 = 1.0 / (D ** 0.5)
    w1 = jax.random.uniform(kw1, (D, F), minval=-bd1, maxval=bd1, dtype=jnp.float32)
    b1 = jax.random.uniform(kb1, (F,), minval=-bd1, maxval=bd1, dtype=jnp.float32)
    bd2 = 1.0 / (F ** 0.5)
    w2 = jax.random.uniform(kw2, (F, D), minval=-bd2, maxval=bd2, dtype=jnp.float32)
    b2 = jax.random.uniform(kb2, (D,), minval=-bd2, maxval=bd2, dtype=jnp.float32)

    out = feed_forward_block(x, w1, b1, w2, b2)
    out = jax.block_until_ready(out)

    ref = _reference(x, w1, b1, w2, b2)
    assert out.shape == (B, S, D)
    assert jnp.allclose(out, ref, atol=1e-4, rtol=1e-4), "mismatch vs reference"

    print("KERNEL_OK")
</pallas_src>

<mosaic_0001>
module attributes {stable_mosaic.version = 11 : i64} {
  func.func @_ffn_kernel_resident(%arg0: i32, %arg1: memref<16x128xf32, #tpu.memory_space<vmem>>, %arg2: memref<128x128xf32, #tpu.memory_space<vmem>>, %arg3: memref<1x128xf32, #tpu.memory_space<vmem>>, %arg4: memref<128x128xf32, #tpu.memory_space<vmem>>, %arg5: memref<1x128xf32, #tpu.memory_space<vmem>>, %arg6: memref<16x128xf32, #tpu.memory_space<vmem>>) attributes {dimension_semantics = [#tpu.dimension_semantics<parallel>], iteration_bounds = array<i64: 1>, scalar_prefetch = 0 : i64, scratch_operands = 0 : i64, tpu.core_type = #tpu.core_type<tc>, window_params = [{transform_indices = @transform_0, window_bounds = array<i64: 16, 128>}, {pipeline_mode = #tpu.pipeline_mode<synchronous>, transform_indices = @transform_1, window_bounds = array<i64: 128, 128>}, {pipeline_mode = #tpu.pipeline_mode<synchronous>, transform_indices = @transform_2, window_bounds = array<i64: 1, 128>}, {pipeline_mode = #tpu.pipeline_mode<synchronous>, transform_indices = @transform_3, window_bounds = array<i64: 128, 128>}, {pipeline_mode = #tpu.pipeline_mode<synchronous>, transform_indices = @transform_4, window_bounds = array<i64: 1, 128>}, {transform_indices = @transform_5, window_bounds = array<i64: 16, 128>}]} {
    %c0 = arith.constant 0 : index
    %c0_0 = arith.constant 0 : index
    %0 = vector.load %arg1[%c0, %c0_0] : memref<16x128xf32, #tpu.memory_space<vmem>>, vector<16x128xf32>
    %c0_1 = arith.constant 0 : index
    %c0_2 = arith.constant 0 : index
    %1 = vector.load %arg2[%c0_1, %c0_2] : memref<128x128xf32, #tpu.memory_space<vmem>>, vector<128x128xf32>
    %cst = arith.constant dense<0.000000e+00> : vector<16x128xf32>
    %2 = tpu.matmul %0, %1, %cst {dimension_numbers = #tpu.dot_dimension_numbers<[1], [0], [0], [1], [0, 0, 1, 1], [], []>} : vector<16x128xf32>, vector<128x128xf32>, vector<16x128xf32> -> vector<16x128xf32>
    %c0_3 = arith.constant 0 : index
    %c0_4 = arith.constant 0 : index
    %3 = vector.load %arg3[%c0_3, %c0_4] : memref<1x128xf32, #tpu.memory_space<vmem>>, vector<1x128xf32>
    %4 = vector.broadcast %3 : vector<1x128xf32> to vector<16x128xf32>
    %5 = arith.addf %2, %4 : vector<16x128xf32>
    %cst_5 = arith.constant 0.000000e+00 : f32
    %6 = vector.broadcast %cst_5 : f32 to vector<16x128xf32>
    %7 = arith.maximumf %5, %6 : vector<16x128xf32>
    %c0_6 = arith.constant 0 : index
    %c0_7 = arith.constant 0 : index
    %8 = vector.load %arg4[%c0_6, %c0_7] : memref<128x128xf32, #tpu.memory_space<vmem>>, vector<128x128xf32>
    %cst_8 = arith.constant dense<0.000000e+00> : vector<16x128xf32>
    %9 = tpu.matmul %7, %8, %cst_8 {dimension_numbers = #tpu.dot_dimension_numbers<[1], [0], [0], [1], [0, 0, 1, 1], [], []>} : vector<16x128xf32>, vector<128x128xf32>, vector<16x128xf32> -> vector<16x128xf32>
    %c0_9 = arith.constant 0 : index
    %c0_10 = arith.constant 0 : index
    %10 = vector.load %arg5[%c0_9, %c0_10] : memref<1x128xf32, #tpu.memory_space<vmem>>, vector<1x128xf32>
    %11 = vector.broadcast %10 : vector<1x128xf32> to vector<16x128xf32>
    %12 = arith.addf %9, %11 : vector<16x128xf32>
    %c0_11 = arith.constant 0 : index
    %c0_12 = arith.constant 0 : index
    %13 = vector.load %arg6[%c0_11, %c0_12] : memref<16x128xf32, #tpu.memory_space<vmem>>, vector<16x128xf32>
    tpu.vector_store %arg6[%c0_11, %c0_12], %12 {strides = array<i32>} : memref<16x128xf32, #tpu.memory_space<vmem>>, vector<16x128xf32>,
    return
  }
  func.func @transform_0(%arg0: i32) -> (i32, i32) {
    %c0_i32 = arith.constant 0 : i32
    %c0_i32_0 = arith.constant 0 : i32
    return %arg0, %c0_i32 : i32, i32
  }
  func.func @transform_1(%arg0: i32) -> (i32, i32) {
    %c0_i32 = arith.constant 0 : i32
    %c0_i32_0 = arith.constant 0 : i32
    %c0_i32_1 = arith.constant 0 : i32
    return %c0_i32, %c0_i32_0 : i32, i32
  }
  func.func @transform_2(%arg0: i32) -> (i32, i32) {
    %c0_i32 = arith.constant 0 : i32
    %c0_i32_0 = arith.constant 0 : i32
    %c0_i32_1 = arith.constant 0 : i32
    return %c0_i32, %c0_i32_0 : i32, i32
  }
  func.func @transform_3(%arg0: i32) -> (i32, i32) {
    %c0_i32 = arith.constant 0 : i32
    %c0_i32_0 = arith.constant 0 : i32
    %c0_i32_1 = arith.constant 0 : i32
    return %c0_i32, %c0_i32_0 : i32, i32
  }
  func.func @transform_4(%arg0: i32) -> (i32, i32) {
    %c0_i32 = arith.constant 0 : i32
    %c0_i32_0 = arith.constant 0 : i32
    %c0_i32_1 = arith.constant 0 : i32
    return %c0_i32, %c0_i32_0 : i32, i32
  }
  func.func @transform_5(%arg0: i32) -> (i32, i32) {
    %c0_i32 = arith.constant 0 : i32
    %c0_i32_0 = arith.constant 0 : i32
    return %arg0, %c0_i32 : i32, i32
  }
}

</mosaic_0001>

<llo_original>
// kernel: feed_forward_block.1
$region0: #{feed_forward_block.1}
  #allocation0 [shape = 'u32[]', space=smem, size = 0x4, offset = 0x4, fixed_abs, tag = 'smem constant byte address 0x4 - core index']
  #allocation1 [shape = 'u32[144,128]{1,0:T(1,128)}', space=vmem, size = 0x12000, scoped, tag = 'internal scratch']
  %s0 = inlined_call_operand.vmem [shape: f32[16,128], index: 0, kind: input, shape index: {}]
  %s1 = inlined_call_operand.vmem [shape: f32[128,128], index: 1, kind: input, shape index: {}]
  %s2 = inlined_call_operand.vmem [shape: f32[1,128], index: 2, kind: input, shape index: {}]
  %s3 = inlined_call_operand.vmem [shape: f32[128,128], index: 3, kind: input, shape index: {}]
  %s4 = inlined_call_operand.vmem [shape: f32[1,128], index: 4, kind: input, shape index: {}]
  %s5 = inlined_call_operand.vmem [shape: f32[16,128], index: 5, kind: output, shape index: {}]
  %s6 = sld [smem:[#allocation0]]
  $region30: #{feed_forward_block.1} parent=0
    _
  %s8 = ssub.s32 1, %s6
  %s9 = scalar_select 0, %s8, %s6
  // Predicated region
  $region2: #{feed_forward_block.1} parent=0 // pred_check
    _
  $region3: #{feed_forward_block.1} parent=0 // pred_check_branch
    %11 = sbr.rel (0) target = $region5
  $region4: #{feed_forward_block.1} parent=0 // pred_region
    _
  $region5: #{feed_forward_block.1} parent=0 // pred_fallthru
    _
  // Predicated region
  $region6: #{feed_forward_block.1} parent=0 // pred_check
    _
  $region7: #{feed_forward_block.1} parent=0 // pred_check_branch
    %13 = sbr.rel (0) target = $region9
  $region8: #{feed_forward_block.1} parent=0 // pred_region
    _
  $region9: #{feed_forward_block.1} parent=0 // pred_fallthru
    _
  // Predicated region
  $region10: #{feed_forward_block.1} parent=0 // pred_check
    _
  $region11: #{feed_forward_block.1} parent=0 // pred_check_branch
    %15 = sbr.rel (0) target = $region13
  $region12: #{feed_forward_block.1} parent=0 // pred_region
    _
  $region13: #{feed_forward_block.1} parent=0 // pred_fallthru
    _
  // Predicated region
  $region14: #{feed_forward_block.1} parent=0 // pred_check
    _
  $region15: #{feed_forward_block.1} parent=0 // pred_check_branch
    %17 = sbr.rel (0) target = $region17
  $region16: #{feed_forward_block.1} parent=0 // pred_region
    _
  $region17: #{feed_forward_block.1} parent=0 // pred_fallthru
    _
  // Predicated region
  $region18: #{feed_forward_block.1} parent=0 // pred_check
    _
  $region19: #{feed_forward_block.1} parent=0 // pred_check_branch
    %19 = sbr.rel (0) target = $region21
  $region20: #{feed_forward_block.1} parent=0 // pred_region
    _
  $region21: #{feed_forward_block.1} parent=0 // pred_fallthru
    _
  %v20 = vld [vmem:[%s0] sm:$0xff]
  %v21 = vld [vmem:[%s0 + $0x8] sm:$0xff]
  %v22 = vld [vmem:[%s1] sm:$0xff]
  %v23 = vld [vmem:[%s1 + $0x8] sm:$0xff]
  %v24 = vld [vmem:[%s1 + $0x10] sm:$0xff]
  %v25 = vld [vmem:[%s1 + $0x18] sm:$0xff]
  %v26 = vld [vmem:[%s1 + $0x20] sm:$0xff]
  %v27 = vld [vmem:[%s1 + $0x28] sm:$0xff]
  %v28 = vld [vmem:[%s1 + $0x30] sm:$0xff]
  %v29 = vld [vmem:[%s1 + $0x38] sm:$0xff]
  %v30 = vld [vmem:[%s1 + $0x40] sm:$0xff]
  %v31 = vld [vmem:[%s1 + $0x48] sm:$0xff]
  %v32 = vld [vmem:[%s1 + $0x50] sm:$0xff]
  %v33 = vld [vmem:[%s1 + $0x58] sm:$0xff]
  %v34 = vld [vmem:[%s1 + $0x60] sm:$0xff]
  %v35 = vld [vmem:[%s1 + $0x68] sm:$0xff]
  %v36 = vld [vmem:[%s1 + $0x70] sm:$0xff]
  %v37 = vld [vmem:[%s1 + $0x78] sm:$0xff]
  %v38 = vld [vmem:[%s2] sm:$0x1]
  %v40 = vlaneseq
  %v41 = vshrl.u32 %v40, 7
  %v42 = vsub.s32 0, %v41
  %v43 = vrot.slane %v38, %v42
  %45 = vmatprep.subr.mxu0 0.0
  %46 = vmatpush1.msra.mxu0 %v37
  %47 = vmatprep.subr.mxu0 0.0
  %48 = vmatpush1.msra.mxu0 %v36
  %49 = vmatprep.subr.mxu0 0.0
  %50 = vmatpush1.msra.mxu0 %v35
  %51 = vmatprep.subr.mxu0 0.0
  %52 = vmatpush1.msra.mxu0 %v34
  %53 = vmatprep.subr.mxu0 0.0
  %54 = vmatpush1.msra.mxu0 %v33
  %55 = vmatprep.subr.mxu0 0.0
  %56 = vmatpush1.msra.mxu0 %v32
  %57 = vmatprep.subr.mxu0 0.0
  %58 = vmatpush1.msra.mxu0 %v31
  %59 = vmatprep.subr.mxu0 0.0
  %60 = vmatpush1.msra.mxu0 %v30
  %61 = vmatprep.subr.mxu0 0.0
  %62 = vmatpush1.msra.mxu0 %v29
  %63 = vmatprep.subr.mxu0 0.0
  %64 = vmatpush1.msra.mxu0 %v28
  %65 = vmatprep.subr.mxu0 0.0
  %66 = vmatpush1.msra.mxu0 %v27
  %67 = vmatprep.subr.mxu0 0.0
  %68 = vmatpush1.msra.mxu0 %v26
  %69 = vmatprep.subr.mxu0 0.0
  %70 = vmatpush1.msra.mxu0 %v25
  %71 = vmatprep.subr.mxu0 0.0
  %72 = vmatpush1.msra.mxu0 %v24
  %73 = vmatprep.subr.mxu0 0.0
  %74 = vmatpush1.msra.mxu0 %v23
  %75 = vmatprep.subr.mxu0 0.0
  %76 = vmatpush1.msra.mxu0 %v22
  %77 = vmatprep.subr.mxu0 0.0
  %78 = vmatpush2.msra.mxu0 0.0
  %79 = vmatprep.subr.mxu0 0.0
  %80 = vmatpush2.msra.mxu0 0.0
  %81 = vmatprep.subr.mxu0 0.0
  %82 = vmatpush2.msra.mxu0 0.0
  %83 = vmatprep.subr.mxu0 0.0
  %84 = vmatpush2.msra.mxu0 0.0
  %85 = vmatprep.subr.mxu0 0.0
  %86 = vmatpush2.msra.mxu0 0.0
  %87 = vmatprep.subr.mxu0 0.0
  %88 = vmatpush2.msra.mxu0 0.0
  %89 = vmatprep.subr.mxu0 0.0
  %90 = vmatpush2.msra.mxu0 0.0
  %91 = vmatprep.subr.mxu0 0.0
  %92 = vmatpush2.msra.mxu0 0.0
  %93 = vmatprep.subr.mxu0 0.0
  %94 = vmatpush2.msra.mxu0 0.0
  %95 = vmatprep.subr.mxu0 0.0
  %96 = vmatpush2.msra.mxu0 0.0
  %97 = vmatprep.subr.mxu0 0.0
  %98 = vmatpush2.msra.mxu0 0.0
  %99 = vmatprep.subr.mxu0 0.0
  %100 = vmatpush2.msra.mxu0 0.0
  %101 = vmatprep.subr.mxu0 0.0
  %102 = vmatpush2.msra.mxu0 0.0
  %103 = vmatprep.subr.mxu0 0.0
  %104 = vmatpush2.msra.mxu0 0.0
  %105 = vmatprep.subr.mxu0 0.0
  %106 = vmatpush2.msra.mxu0 0.0
  %107 = vmatprep.subr.mxu0 0.0
  %108 = vmatpush2.msra.mxu0 0.0
  %109 = vmatprep.mubr.f32.mxu0 0.0
  %110 = vmatmul.mubr.f32.gmra.mxu0 %v20
  %v111 = vpop.f32.mrf.mxu0
  %v112 = vadd.f32 %v43, %v111
  %v113 = vpop.f32.mrf.mxu0
  %114 = vmatprep.mubr.f32.mxu0 0.0
  %115 = vmatmul.mubr.f32.gmra.mxu0 %v21
  %v116 = vpop.f32.mrf.mxu0
  %v117 = vadd.f32 %v43, %v116
  %v118 = vpop.f32.mrf.mxu0
  %119 = vdwg.mxu0
  %v120 = vmax.f32 %v112, 0.0
  %v121 = vmax.f32 %v117, 0.0
  %v122 = vld [vmem:[%s3] sm:$0xff]
  %v123 = vld [vmem:[%s3 + $0x8] sm:$0xff]
  %v124 = vld [vmem:[%s3 + $0x10] sm:$0xff]
  %v125 = vld [vmem:[%s3 + $0x18] sm:$0xff]
  %v126 = vld [vmem:[%s3 + $0x20] sm:$0xff]
  %v127 = vld [vmem:[%s3 + $0x28] sm:$0xff]
  %v128 = vld [vmem:[%s3 + $0x30] sm:$0xff]
  %v129 = vld [vmem:[%s3 + $0x38] sm:$0xff]
  %v130 = vld [vmem:[%s3 + $0x40] sm:$0xff]
  %v131 = vld [vmem:[%s3 + $0x48] sm:$0xff]
  %v132 = vld [vmem:[%s3 + $0x50] sm:$0xff]
  %v133 = vld [vmem:[%s3 + $0x58] sm:$0xff]
  %v134 = vld [vmem:[%s3 + $0x60] sm:$0xff]
  %v135 = vld [vmem:[%s3 + $0x68] sm:$0xff]
  %v136 = vld [vmem:[%s3 + $0x70] sm:$0xff]
  %v137 = vld [vmem:[%s3 + $0x78] sm:$0xff]
  %v138 = vld [vmem:[%s4] sm:$0x1]
  %v140 = vlaneseq
  %v141 = vshrl.u32 %v140, 7
  %v142 = vsub.s32 0, %v141
  %v143 = vrot.slane %v138, %v142
  %145 = vmatprep.subr.mxu0 0.0
  %146 = vmatpush1.msra.mxu0 %v137
  %147 = vmatprep.subr.mxu0 0.0
  %148 = vmatpush1.msra.mxu0 %v136
  %149 = vmatprep.subr.mxu0 0.0
  %150 = vmatpush1.msra.mxu0 %v135
  %151 = vmatprep.subr.mxu0 0.0
  %152 = vmatpush1.msra.mxu0 %v134
  %153 = vmatprep.subr.mxu0 0.0
  %154 = vmatpush1.msra.mxu0 %v133
  %155 = vmatprep.subr.mxu0 0.0
  %156 = vmatpush1.msra.mxu0 %v132
  %157 = vmatprep.subr.mxu0 0.0
  %158 = vmatpush1.msra.mxu0 %v131
  %159 = vmatprep.subr.mxu0 0.0
  %160 = vmatpush1.msra.mxu0 %v130
  %161 = vmatprep.subr.mxu0 0.0
  %162 = vmatpush1.msra.mxu0 %v129
  %163 = vmatprep.subr.mxu0 0.0
  %164 = vmatpush1.msra.mxu0 %v128
  %165 = vmatprep.subr.mxu0 0.0
  %166 = vmatpush1.msra.mxu0 %v127
  %167 = vmatprep.subr.mxu0 0.0
  %168 = vmatpush1.msra.mxu0 %v126
  %169 = vmatprep.subr.mxu0 0.0
  %170 = vmatpush1.msra.mxu0 %v125
  %171 = vmatprep.subr.mxu0 0.0
  %172 = vmatpush1.msra.mxu0 %v124
  %173 = vmatprep.subr.mxu0 0.0
  %174 = vmatpush1.msra.mxu0 %v123
  %175 = vmatprep.subr.mxu0 0.0
  %176 = vmatpush1.msra.mxu0 %v122
  %177 = vmatprep.subr.mxu0 0.0
  %178 = vmatpush2.msra.mxu0 0.0
  %179 = vmatprep.subr.mxu0 0.0
  %180 = vmatpush2.msra.mxu0 0.0
  %181 = vmatprep.subr.mxu0 0.0
  %182 = vmatpush2.msra.mxu0 0.0
  %183 = vmatprep.subr.mxu0 0.0
  %184 = vmatpush2.msra.mxu0 0.0
  %185 = vmatprep.subr.mxu0 0.0
  %186 = vmatpush2.msra.mxu0 0.0
  %187 = vmatprep.subr.mxu0 0.0
  %188 = vmatpush2.msra.mxu0 0.0
  %189 = vmatprep.subr.mxu0 0.0
  %190 = vmatpush2.msra.mxu0 0.0
  %191 = vmatprep.subr.mxu0 0.0
  %192 = vmatpush2.msra.mxu0 0.0
  %193 = vmatprep.subr.mxu0 0.0
  %194 = vmatpush2.msra.mxu0 0.0
  %195 = vmatprep.subr.mxu0 0.0
  %196 = vmatpush2.msra.mxu0 0.0
  %197 = vmatprep.subr.mxu0 0.0
  %198 = vmatpush2.msra.mxu0 0.0
  %199 = vmatprep.subr.mxu0 0.0
  %200 = vmatpush2.msra.mxu0 0.0
  %201 = vmatprep.subr.mxu0 0.0
  %202 = vmatpush2.msra.mxu0 0.0
  %203 = vmatprep.subr.mxu0 0.0
  %204 = vmatpush2.msra.mxu0 0.0
  %205 = vmatprep.subr.mxu0 0.0
  %206 = vmatpush2.msra.mxu0 0.0
  %207 = vmatprep.subr.mxu0 0.0
  %208 = vmatpush2.msra.mxu0 0.0
  %209 = vmatprep.mubr.f32.mxu0 0.0
  %210 = vmatmul.mubr.f32.gmra.mxu0 %v120
  %v211 = vpop.f32.mrf.mxu0
  %v212 = vadd.f32 %v143, %v211
  %v213 = vpop.f32.mrf.mxu0
  %214 = vmatprep.mubr.f32.mxu0 0.0
  %215 = vmatmul.mubr.f32.gmra.mxu0 %v121
  %v216 = vpop.f32.mrf.mxu0
  %v217 = vadd.f32 %v143, %v216
  %v218 = vpop.f32.mrf.mxu0
  %219 = vdwg.mxu0
  %220 = vst [vmem:[%s5] sm:$0xff] %v212
  %221 = vst [vmem:[%s5 + $0x8] sm:$0xff] %v217
  // Predicated region
  $region22: #{feed_forward_block.1} parent=0 // pred_check
    _
  $region23: #{feed_forward_block.1} parent=0 // pred_check_branch
    %223 = sbr.rel (0) target = $region25
  $region24: #{feed_forward_block.1} parent=0 // pred_region
    _
  $region25: #{feed_forward_block.1} parent=0 // pred_fallthru
    _
  // Predicated region
  $region26: #{feed_forward_block.1} parent=0 // pred_check
    _
  $region27: #{feed_forward_block.1} parent=0 // pred_check_branch
    %225 = sbr.rel (0) target = $region29
  $region28: #{feed_forward_block.1} parent=0 // pred_region
    _
  $region29: #{feed_forward_block.1} parent=0 // pred_fallthru
    _

</llo_original>
